<compile_context>
chip_gen: v6e
topology: v6e:2x2x1
jax: 0.10.0
libtpu: 0.0.40
codegen_flags: <defaults>
</compile_context>

<pallas_src>
import functools

import numpy as np

import jax
import jax.numpy as jnp
from jax.experimental import pallas as pl
from jax.experimental.pallas import tpu as pltpu


# ----------------------------------------------------------------------------
# Pallas kernel: banded ("lowered") 3x3 conv as ONE MXU matmul per grid step.
#   x_ref : (Bblk, Hv, Lx)     folded input view, Lx = F*W*Cin   (lane dense)
#   m_ref : (T*Lx, N)          banded weight matrix (taps/pad/stride/upsample)
#   b_ref : (1, N)             bias replicated across the folded width
#   r_ref : (Bblk, Hrows, N)   optional fused residual (same layout as output)
#   o_ref : (Bblk, Hrows, N)   folded output view                (lane dense)
#   xp_ref: VMEM scratch (Bblk, pad_top+Hv+pad_bot, Lx) for the height halo
# ----------------------------------------------------------------------------
def _band_conv_kernel(*refs, pad_top, relu, has_res):
    if has_res:
        x_ref, m_ref, b_ref, r_ref, o_ref, xp_ref = refs
    else:
        x_ref, m_ref, b_ref, o_ref, xp_ref = refs
        r_ref = None

    Bblk, Hv, Lx = x_ref.shape
    Hrows, N = o_ref.shape[1], o_ref.shape[2]
    T = m_ref.shape[0] // Lx
    pad_bot = xp_ref.shape[1] - pad_top - Hv

    # --- in-kernel zero padding (height halo) into VMEM scratch -------------
    if pad_top:
        xp_ref[:, 0:pad_top, :] = jnp.zeros((Bblk, pad_top, Lx), xp_ref.dtype)
    if pad_bot:
        xp_ref[:, pad_top + Hv:pad_top + Hv + pad_bot, :] = jnp.zeros(
            (Bblk, pad_bot, Lx), xp_ref.dtype)
    xp_ref[:, pad_top:pad_top + Hv, :] = x_ref[...]

    # --- banded im2row: T row-shifted slabs concatenated on the lane axis ---
    # Lx is a multiple of 128, so the concat offsets are vreg aligned (no lane
    # shuffles) and the single matmul has K = T*Lx, N >= 128.
    lhs = jnp.concatenate([xp_ref[:, t:t + Hrows, :] for t in range(T)], axis=-1)
    lhs = lhs.reshape(Bblk * Hrows, T * Lx)
    acc = jnp.dot(lhs, m_ref[...], preferred_element_type=jnp.float32)

    # --- fused epilogue: bias + ReLU (+ residual add) ------------------------
    acc = acc + b_ref[...]
    if relu:
        acc = jnp.maximum(acc, 0.0)
    out = acc.reshape(Bblk, Hrows, N)
    if has_res:
        out = out + r_ref[...]
    o_ref[...] = out.astype(o_ref.dtype)


# ----------------------------------------------------------------------------
# Fold-factor selection: smallest output-row group G such that both the folded
# input lane width (stride*G*W*Cin) and the folded output lane width
# (G*rh*Wout*rw*Cout) reach 128 lanes (dense vregs / unmasked stores).
# ----------------------------------------------------------------------------
def _pick_fold(H, W, Cin, Cout, s, rh, rw, lane_target=128):
    Hout, Wout = H // s, W // s
    G = Hout
    for g in range(1, Hout + 1):
        if Hout % g:
            continue
        G = g
        if s * g * W * Cin >= lane_target and g * rh * Wout * rw * Cout >= lane_target:
            break
    return G


# ----------------------------------------------------------------------------
# Build the banded weight matrix for one 3x3 (pad=1) conv.
#   * stride and width zero-padding are baked into the column mapping,
#   * `up=(rh, rw)` bakes a nearest-neighbour upsample of the conv output into
#     duplicated columns (used for the fused l2h + upsample path).
# Returns (M, bias_row, meta) where meta describes the folded views used by
# the kernel:   input view (B, H//F, F*W*Cin),  output view (B, Hrows, N).
# ----------------------------------------------------------------------------
def build_banded_conv(w, b, *, H, W, stride=1, up=(1, 1), lane_target=128):
    KH, KW, Cin, Cout = w.shape
    pad = KH // 2
    s = stride
    rh, rw = up
    assert H % s == 0 and W % s == 0, "stride must divide spatial dims (k=3, pad=1)"
    Hout, Wout = H // s, W // s

    G = _pick_fold(H, W, Cin, Cout, s, rh, rw, lane_target)
    F = s * G                                   # input row fold
    Hv, Hrows = H // F, Hout // G               # folded input / output rows
    Lx = F * W * Cin                            # folded input lane width
    Nout = G * rh * Wout * rw * Cout            # folded output lane width

    pad_top = -(-pad // F)                      # ceil(pad / F)  (== 1 here)
    d_max = s * (G - 1) + (KH - 1) - pad
    T = (d_max + pad_top * F) // F + 1          # number of row slabs
    pad_bot = max(0, Hrows + T - 1 - pad_top - Hv)
    K = T * Lx

    # ---- static index arithmetic (host-side numpy) --------------------------
    kh, kw, ci, co, m, wu = np.meshgrid(
        np.arange(KH), np.arange(KW), np.arange(Cin), np.arange(Cout),
        np.arange(G * rh), np.arange(Wout * rw), indexing="ij")
    j = m // rh                                  # conv-output row within group
    wo = wu // rw                                # conv-output column
    d = s * j + kh - pad                         # input row offset rel. to F*q
    t = (d + pad_top * F) // F                   # which row slab
    slot = (d + pad_top * F) % F                 # slot inside the folded super-row
    wi = s * wo + kw - pad                       # input column (width pad via mask)
    valid = (wi >= 0) & (wi < W)

    rows = (t * Lx + slot * (W * Cin) + wi * Cin + ci)[valid].astype(np.int32)
    cols = (m * (Wout * rw * Cout) + wu * Cout + co)[valid].astype(np.int32)
    taps = ((((kh * KW + kw) * Cin + ci) * Cout + co)[valid]).astype(np.int32)

    M = jnp.zeros((K, Nout), w.dtype)
    M = M.at[jnp.asarray(rows), jnp.asarray(cols)].add(
        w.reshape(-1)[jnp.asarray(taps)])
    bias_row = jnp.tile(b, Nout // Cout).reshape(1, Nout)

    meta = dict(F=F, G=G, T=T, Lx=Lx, N=Nout, Hv=Hv, Hrows=Hrows,
                pad_top=pad_top, pad_bot=pad_bot,
                Hout=Hout * rh, Wout=Wout * rw, Cout=Cout)
    return M, bias_row, meta


# ----------------------------------------------------------------------------
# pallas_call wrapper for one banded conv (+ fused bias/ReLU/residual).
# ----------------------------------------------------------------------------
def banded_conv(x_view, M, bias_row, meta, *, residual=None, relu=True):
    B = x_view.shape[0]
    Bblk = B // 2 if (B % 2 == 0 and B >= 2) else B   # >=2 parallel steps for megacore
    steps = B // Bblk

    Hv, Lx = meta["Hv"], meta["Lx"]
    Hrows, N = meta["Hrows"], meta["N"]
    pad_top, pad_bot = meta["pad_top"], meta["pad_bot"]

    kernel = functools.partial(_band_conv_kernel, pad_top=pad_top, relu=relu,
                               has_res=residual is not None)

    in_specs = [
        pl.BlockSpec((Bblk, Hv, Lx), lambda i: (i, 0, 0)),
        pl.BlockSpec(M.shape, lambda i: (0, 0)),
        pl.BlockSpec((1, N), lambda i: (0, 0)),
    ]
    args = [x_view, M, bias_row]
    if residual is not None:
        in_specs.append(pl.BlockSpec((Bblk, Hrows, N), lambda i: (i, 0, 0)))
        args.append(residual)

    return pl.pallas_call(
        kernel,
        out_shape=jax.ShapeDtypeStruct((B, Hrows, N), x_view.dtype),
        grid=(steps,),
        in_specs=in_specs,
        out_specs=pl.BlockSpec((Bblk, Hrows, N), lambda i: (i, 0, 0)),
        scratch_shapes=[pltpu.VMEM((Bblk, pad_top + Hv + pad_bot, Lx), x_view.dtype)],
        compiler_params=pltpu.CompilerParams(dimension_semantics=("parallel",)),
    )(*args)


# ----------------------------------------------------------------------------
# SequenceWise fold / unfold: (T, N, C, H, W) <-> (T*N, H, W, C)
# ----------------------------------------------------------------------------
def _fold(x):
    T, N, C, H, W = x.shape
    return jnp.transpose(x.reshape(T * N, C, H, W), (0, 2, 3, 1)), (T, N)


def _unfold(x_nhwc, tn):
    T, N = tn
    B, H, W, C = x_nhwc.shape
    return jnp.transpose(x_nhwc, (0, 3, 1, 2)).reshape(T, N, C, H, W)


# ----------------------------------------------------------------------------
# OctConv forward (Pallas path): (l, h) -> (l, h)
#   h = convh2h(h); l = convl2l(l); h += up(convl2h(l), h); l += convh2l(h)
# ----------------------------------------------------------------------------
def oct_conv_forward(l, h, params, *, stride=2):
    h_n, tn = _fold(h)                 # (B, Hh, Wh, Ch)
    l_n, _ = _fold(l)                  # (B, Hl, Wl, Cl)
    B, Hh, Wh, _ = h_n.shape
    _, Hl, Wl, _ = l_n.shape
    rh, rw = Hh // Hl, Wh // Wl        # sequence_upsample (nearest) ratio

    w_h2h, b_h2h = params["h2h"]
    w_l2l, b_l2l = params["l2l"]
    w_l2h, b_l2h = params["l2h"]
    w_h2l, b_h2l = params["h2l"]
    Cout_h, Cout_l = w_h2h.shape[-1], w_l2l.shape[-1]

    # convh2h (stride 1) ------------------------------------------------------
    M1, bias1, m1 = build_banded_conv(w_h2h, b_h2h, H=Hh, W=Wh)
    ha = banded_conv(h_n.reshape(B, m1["Hv"], m1["Lx"]), M1, bias1, m1)

    # convl2l (stride 1) ------------------------------------------------------
    M2, bias2, m2 = build_banded_conv(w_l2l, b_l2l, H=Hl, W=Wl)
    l1 = banded_conv(l_n.reshape(B, m2["Hv"], m2["Lx"]), M2, bias2, m2)

    # convl2h fused with nearest upsample + residual add of convh2h output ----
    M3, bias3, m3 = build_banded_conv(w_l2h, b_l2h, H=Hl, W=Wl, up=(rh, rw))
    h1 = banded_conv(l1.reshape(B, m3["Hv"], m3["Lx"]), M3, bias3, m3,
                     residual=ha.reshape(B, m3["Hrows"], m3["N"]))

    # convh2l (stride) fused with residual add of convl2l output --------------
    M4, bias4, m4 = build_banded_conv(w_h2l, b_h2l, H=Hh, W=Wh, stride=stride)
    l_out = banded_conv(h1.reshape(B, m4["Hv"], m4["Lx"]), M4, bias4, m4,
                        residual=l1.reshape(B, m4["Hrows"], m4["N"]))

    h_out = _unfold(h1.reshape(B, Hh, Wh, Cout_h), tn)
    l_out = _unfold(l_out.reshape(B, Hl, Wl, Cout_l), tn)
    return l_out, h_out


# ----------------------------------------------------------------------------
# Pure-JAX reference (for the correctness check)
# ----------------------------------------------------------------------------
def _ref_conv(x_nhwc, w, b, *, stride=1):
    pad = w.shape[0] // 2
    y = jax.lax.conv_general_dilated(
        x_nhwc, w, (stride, stride), ((pad, pad), (pad, pad)),
        dimension_numbers=("NHWC", "HWIO", "NHWC"),
        precision=jax.lax.Precision.HIGHEST)
    return jnp.maximum(y + b, 0.0)


def oct_conv_forward_ref(l, h, params, *, stride=2):
    h_n, tn = _fold(h)
    l_n, _ = _fold(l)
    rh, rw = h_n.shape[1] // l_n.shape[1], h_n.shape[2] // l_n.shape[2]
    ha = _ref_conv(h_n, *params["h2h"])
    l1 = _ref_conv(l_n, *params["l2l"])
    lh = _ref_conv(l1, *params["l2h"])
    h1 = ha + jnp.repeat(jnp.repeat(lh, rh, axis=1), rw, axis=2)
    l_out = l1 + _ref_conv(h1, *params["h2l"], stride=stride)
    return _unfold(l_out, tn), _unfold(h1, tn)


# ----------------------------------------------------------------------------
# Deterministic parameter init (shapes from OctConv.__init__ / make_conv)
# ----------------------------------------------------------------------------
def init_params(key, in_channels, out_channels, k=3):
    cin_l, cin_h = in_channels
    cout_l, cout_h = out_channels

    def conv_init(key, cin, cout):
        kw_, kb_ = jax.random.split(key)
        fan_in = cin * k * k
        w = jax.random.normal(kw_, (k, k, cin, cout), jnp.float32) / jnp.sqrt(fan_in)
        b = 0.01 * jax.random.normal(kb_, (cout,), jnp.float32)
        return (w, b)

    keys = jax.random.split(key, 4)
    return {
        "h2h": conv_init(keys[0], cin_h, cout_h),
        "l2l": conv_init(keys[1], cin_l, cout_l),
        "l2h": conv_init(keys[2], cout_l, cout_h),
        "h2l": conv_init(keys[3], cout_h, cout_l),
    }


if __name__ == "__main__":
    key = jax.random.PRNGKey(0)
    k_l, k_h, k_p = jax.random.split(key, 3)

    # make_conv(cin=8, cout=8, f=2, stride=2):
    #   branch 0 = "low"  : cin=8  channels at half resolution
    #   branch 1 = "high" : cin//2 channels at full resolution
    T, N = 2, 2
    cin, cout, f, stride = 8, 8, 2, 2
    cin2, cout2 = cin // f, cout // f
    H, W = 16, 16

    l = jax.random.normal(k_l, (T, N, cin, H // 2, W // 2), jnp.float32)
    h = jax.random.normal(k_h, (T, N, cin2, H, W), jnp.float32)
    params = init_params(k_p, (cin, cin2), (cout, cout2))

    l_out, h_out = oct_conv_forward(l, h, params, stride=stride)
    jax.block_until_ready((l_out, h_out))

    assert l_out.shape == (T, N, cout, H // 2, W // 2), l_out.shape
    assert h_out.shape == (T, N, cout2, H, W), h_out.shape

    # Cross-check the Pallas path against a pure-JAX reference (tolerance covers
    # the TPU's default reduced-precision f32 matmul passes).
    l_ref, h_ref = oct_conv_forward_ref(l, h, params, stride=stride)
    assert jnp.allclose(l_out, l_ref, atol=5e-2, rtol=5e-2), \
        float(jnp.max(jnp.abs(l_out - l_ref)))
    assert jnp.allclose(h_out, h_ref, atol=5e-2, rtol=5e-2), \
        float(jnp.max(jnp.abs(h_out - h_ref)))

    print("KERNEL_OK")
</pallas_src>

<mosaic_0001>
module attributes {stable_mosaic.version = 11 : i64} {
  func.func @_band_conv_kernel(%arg0: i32, %arg1: memref<2x8x128xf32, #tpu.memory_space<vmem>>, %arg2: memref<384x128xf32, #tpu.memory_space<vmem>>, %arg3: memref<1x128xf32, #tpu.memory_space<vmem>>, %arg4: memref<2x8x128xf32, #tpu.memory_space<vmem>>, %arg5: memref<2x10x128xf32, #tpu.memory_space<vmem>>) attributes {dimension_semantics = [#tpu.dimension_semantics<parallel>], iteration_bounds = array<i64: 2>, scalar_prefetch = 0 : i64, scratch_operands = 1 : i64, tpu.core_type = #tpu.core_type<tc>, window_params = [{transform_indices = @transform_0, window_bounds = array<i64: 2, 8, 128>}, {pipeline_mode = #tpu.pipeline_mode<synchronous>, transform_indices = @transform_1, window_bounds = array<i64: 384, 128>}, {pipeline_mode = #tpu.pipeline_mode<synchronous>, transform_indices = @transform_2, window_bounds = array<i64: 1, 128>}, {transform_indices = @transform_3, window_bounds = array<i64: 2, 8, 128>}]} {
    %cst = arith.constant 0.000000e+00 : f32
    %0 = vector.broadcast %cst : f32 to vector<2x1x128xf32>
    %c0 = arith.constant 0 : index
    %c0_0 = arith.constant 0 : index
    %c0_1 = arith.constant 0 : index
    %1 = vector.load %arg5[%c0, %c0_0, %c0_1] : memref<2x10x128xf32, #tpu.memory_space<vmem>>, vector<2x1x128xf32>
    tpu.vector_store %arg5[%c0, %c0_0, %c0_1], %0 {strides = array<i32>} : memref<2x10x128xf32, #tpu.memory_space<vmem>>, vector<2x1x128xf32>,
    %cst_2 = arith.constant 0.000000e+00 : f32
    %2 = vector.broadcast %cst_2 : f32 to vector<2x1x128xf32>
    %c0_3 = arith.constant 0 : index
    %c9 = arith.constant 9 : index
    %c0_4 = arith.constant 0 : index
    %3 = vector.load %arg5[%c0_3, %c9, %c0_4] : memref<2x10x128xf32, #tpu.memory_space<vmem>>, vector<2x1x128xf32>
    tpu.vector_store %arg5[%c0_3, %c9, %c0_4], %2 {strides = array<i32>} : memref<2x10x128xf32, #tpu.memory_space<vmem>>, vector<2x1x128xf32>,
    %c0_5 = arith.constant 0 : index
    %c0_6 = arith.constant 0 : index
    %c0_7 = arith.constant 0 : index
    %4 = vector.load %arg1[%c0_5, %c0_6, %c0_7] : memref<2x8x128xf32, #tpu.memory_space<vmem>>, vector<2x8x128xf32>
    %c0_8 = arith.constant 0 : index
    %c1 = arith.constant 1 : index
    %c0_9 = arith.constant 0 : index
    %5 = vector.load %arg5[%c0_8, %c1, %c0_9] : memref<2x10x128xf32, #tpu.memory_space<vmem>>, vector<2x8x128xf32>
    tpu.vector_store %arg5[%c0_8, %c1, %c0_9], %4 {strides = array<i32>} : memref<2x10x128xf32, #tpu.memory_space<vmem>>, vector<2x8x128xf32>,
    %c0_10 = arith.constant 0 : index
    %c0_11 = arith.constant 0 : index
    %c0_12 = arith.constant 0 : index
    %6 = vector.load %arg5[%c0_10, %c0_11, %c0_12] : memref<2x10x128xf32, #tpu.memory_space<vmem>>, vector<2x8x128xf32>
    %c0_13 = arith.constant 0 : index
    %c1_14 = arith.constant 1 : index
    %c0_15 = arith.constant 0 : index
    %7 = vector.load %arg5[%c0_13, %c1_14, %c0_15] : memref<2x10x128xf32, #tpu.memory_space<vmem>>, vector<2x8x128xf32>
    %c0_16 = arith.constant 0 : index
    %c2 = arith.constant 2 : index
    %c0_17 = arith.constant 0 : index
    %8 = vector.load %arg5[%c0_16, %c2, %c0_17] : memref<2x10x128xf32, #tpu.memory_space<vmem>>, vector<2x8x128xf32>
    %9 = tpu.concatenate %6, %7, %8 in 2 : vector<2x8x128xf32>, vector<2x8x128xf32>, vector<2x8x128xf32> -> vector<2x8x384xf32>
    %10 = vector.shape_cast %9 : vector<2x8x384xf32> to vector<16x384xf32>
    %c0_18 = arith.constant 0 : index
    %c0_19 = arith.constant 0 : index
    %11 = vector.load %arg2[%c0_18, %c0_19] : memref<384x128xf32, #tpu.memory_space<vmem>>, vector<384x128xf32>
    %cst_20 = arith.constant dense<0.000000e+00> : vector<16x128xf32>
    %12 = tpu.matmul %10, %11, %cst_20 {dimension_numbers = #tpu.dot_dimension_numbers<[1], [0], [0], [1], [0, 0, 1, 1], [], []>} : vector<16x384xf32>, vector<384x128xf32>, vector<16x128xf32> -> vector<16x128xf32>
    %c0_21 = arith.constant 0 : index
    %c0_22 = arith.constant 0 : index
    %13 = vector.load %arg3[%c0_21, %c0_22] : memref<1x128xf32, #tpu.memory_space<vmem>>, vector<1x128xf32>
    %14 = vector.broadcast %13 : vector<1x128xf32> to vector<16x128xf32>
    %15 = arith.addf %12, %14 : vector<16x128xf32>
    %cst_23 = arith.constant 0.000000e+00 : f32
    %16 = vector.broadcast %cst_23 : f32 to vector<16x128xf32>
    %17 = arith.maximumf %15, %16 : vector<16x128xf32>
    %18 = vector.shape_cast %17 : vector<16x128xf32> to vector<2x8x128xf32>
    %c0_24 = arith.constant 0 : index
    %c0_25 = arith.constant 0 : index
    %c0_26 = arith.constant 0 : index
    %19 = vector.load %arg4[%c0_24, %c0_25, %c0_26] : memref<2x8x128xf32, #tpu.memory_space<vmem>>, vector<2x8x128xf32>
    tpu.vector_store %arg4[%c0_24, %c0_25, %c0_26], %18 {strides = array<i32>} : memref<2x8x128xf32, #tpu.memory_space<vmem>>, vector<2x8x128xf32>,
    return
  }
  func.func @transform_0(%arg0: i32) -> (i32, i32, i32) {
    %c0_i32 = arith.constant 0 : i32
    %c0_i32_0 = arith.constant 0 : i32
    %c0_i32_1 = arith.constant 0 : i32
    return %arg0, %c0_i32, %c0_i32_0 : i32, i32, i32
  }
  func.func @transform_1(%arg0: i32) -> (i32, i32) {
    %c0_i32 = arith.constant 0 : i32
    %c0_i32_0 = arith.constant 0 : i32
    %c0_i32_1 = arith.constant 0 : i32
    return %c0_i32, %c0_i32_0 : i32, i32
  }
  func.func @transform_2(%arg0: i32) -> (i32, i32) {
    %c0_i32 = arith.constant 0 : i32
    %c0_i32_0 = arith.constant 0 : i32
    %c0_i32_1 = arith.constant 0 : i32
    return %c0_i32, %c0_i32_0 : i32, i32
  }
  func.func @transform_3(%arg0: i32) -> (i32, i32, i32) {
    %c0_i32 = arith.constant 0 : i32
    %c0_i32_0 = arith.constant 0 : i32
    %c0_i32_1 = arith.constant 0 : i32
    return %arg0, %c0_i32, %c0_i32_0 : i32, i32, i32
  }
}

</mosaic_0001>

<llo_original>
// kernel: tpu_custom_call.1
$region0: #{tpu_custom_call.1}
  #allocation0 [shape = 'u32[]', space=smem, size = 0x4, offset = 0x4, fixed_abs, tag = 'smem constant byte address 0x4 - core index']
  #allocation1 [shape = 'u32[144,128]{1,0:T(1,128)}', space=vmem, size = 0x12000, scoped, tag = 'internal scratch']
  #allocation2 [shape = 'f32[2,10,128]{2,1,0:T(8,128)}', space=vmem, size = 0x4000, scoped, tag = 'scratch operand']
  %s0 = inlined_call_operand.hbm [shape: f32[4,8,128], index: 0, kind: input, shape index: {}]
  %s1 = inlined_call_operand.hbm [shape: f32[384,128], index: 1, kind: input, shape index: {}]
  %s2 = inlined_call_operand.vmem [shape: f32[1,128], index: 2, kind: input, shape index: {}]
  %s3 = inlined_call_operand.hbm [shape: f32[4,8,128], index: 3, kind: output, shape index: {}]
  %s4 = sld [smem:[#allocation0]]
  $region53: #{tpu_custom_call.1} parent=0
    _
  %s6 = ssub.s32 1, %s4
  %s7 = scalar_select 0, %s6, %s4
  $region1: #{tpu_custom_call.1} parent=0
    #allocation3 [shape = 'u8[16384]{0}', space=vmem, size = 0x4000, scoped, tag = 'input window, operand 0']
    #allocation4 [shape = 's32[2]{0}', space=sflag, size = 0x8, scoped, tag = 'scoped memory for tpu_custom_call.1']
    #allocation5 [shape = 's32[2]{0}', space=sflag, size = 0x8, scoped, tag = 'scoped memory for tpu_custom_call.1']
    #allocation6 [shape = 'u8[196608]{0}', space=vmem, size = 0x30000, scoped, tag = 'input window, operand 1, single buffered']
    #allocation7 [shape = 's32[1]{0}', space=sflag, size = 0x4, scoped, tag = 'scoped memory for tpu_custom_call.1']
    #allocation8 [shape = 'u8[16384]{0}', space=vmem, size = 0x4000, scoped, tag = 'output window, operand 0']
    %8 = vsyncpa [#allocation4], 0
    %s9 = scalar_lea.sflag [#allocation4], 1
    %10 = vsyncpa %s9, 0
    %11 = vsyncpa [#allocation7], 0
    %12 = vsyncpa [#allocation5], 0
    %s13 = scalar_lea.sflag [#allocation5], 1
    %14 = vsyncpa %s13, 0
    loop: start=0, step=1, limit=4
    $region2: #{tpu_custom_call.1} parent=1 // loop_pre_header
      _
    $region3: #{tpu_custom_call.1} parent=1 // loop_header
      %s16 = sphi 0, %s20
      %p17 = scmp.ge.s32.totalorder %s16, 4
      %s26 = sphi 0, %s28
      %s29 = sphi 0, %s26
      %s30 = sphi 0, %s29
      %s46 = sphi 0, %s30
      %s50 = sphi 0, %s50
      %s52 = sphi 0, %s50
      %s53 = sphi 0, %s52
      %s67 = sphi 0, %s53
      %s71 = sphi 0, %s71
      %s73 = sphi 0, %s71
      %s74 = sphi 0, %s73
      %s88 = sphi 0, %s74
      %s94 = sphi 0, %s96
      %s97 = sphi 0, %s94
      %s98 = sphi 0, %s97
      %s114 = sphi 0, %s98
    $region4: #{tpu_custom_call.1} parent=1 // loop_header_branch
      %19 = sbr.rel (%p17) target = $region8
    $region5: #{tpu_custom_call.1} parent=1 // loop_body
      %s21 = ssub.s32 %s16, 1
      %s22 = ssub.s32 %s16, 2
      %s23 = sadd.s32 %s16, 1
      %s24 = ssub.s32 %s16, %s23
      %p25 = scmp.eq.s32.totalorder %s24, 0
      %s27 = sadd.s32 %s26, 1
      %s28 = scalar_select %p25, %s26, %s27
      %p31 = pneg %p25
      %p32 = scmp.eq.s32.totalorder %s16, 1
      %p33 = por %p31, %p32
      %p34 = scmp.ne.s32.totalorder %s26, %s29
      %p35 = scmp.eq.s32.totalorder %s16, 0
      %p36 = por %p34, %p35
      %p37 = scmp.ne.s32.totalorder %s26, %s29
      %p38 = scmp.eq.s32.totalorder %s21, 1
      %p39 = por %p37, %p38
      %p40 = scmp.ne.s32.totalorder %s29, %s30
      %p41 = scmp.eq.s32.totalorder %s21, 0
      %p42 = por %p40, %p41
      %p43 = scmp.ne.s32.totalorder %s29, %s30
      %p44 = scmp.eq.s32.totalorder %s22, 1
      %p45 = por %p43, %p44
      %p47 = scmp.ne.s32.totalorder %s30, %s46
      %p48 = scmp.eq.s32.totalorder %s22, 0
      %p49 = por %p47, %p48
      %s51 = sadd.s32 %s50, 1
      %p54 = scmp.eq.s32.totalorder %s16, 1
      %p55 = scmp.ne.s32.totalorder %s50, %s52
      %p56 = scmp.eq.s32.totalorder %s16, 0
      %p57 = por %p55, %p56
      %p58 = scmp.ne.s32.totalorder %s50, %s52
      %p59 = scmp.eq.s32.totalorder %s21, 1
      %p60 = por %p58, %p59
      %p61 = scmp.ne.s32.totalorder %s52, %s53
      %p62 = scmp.eq.s32.totalorder %s21, 0
      %p63 = por %p61, %p62
      %p64 = scmp.ne.s32.totalorder %s52, %s53
      %p65 = scmp.eq.s32.totalorder %s22, 1
      %p66 = por %p64, %p65
      %p68 = scmp.ne.s32.totalorder %s53, %s67
      %p69 = scmp.eq.s32.totalorder %s22, 0
      %p70 = por %p68, %p69
      %s72 = sadd.s32 %s71, 1
      %p75 = scmp.eq.s32.totalorder %s16, 1
      %p76 = scmp.ne.s32.totalorder %s71, %s73
      %p77 = scmp.eq.s32.totalorder %s16, 0
      %p78 = por %p76, %p77
      %p79 = scmp.ne.s32.totalorder %s71, %s73
      %p80 = scmp.eq.s32.totalorder %s21, 1
      %p81 = por %p79, %p80
      %p82 = scmp.ne.s32.totalorder %s73, %s74
      %p83 = scmp.eq.s32.totalorder %s21, 0
      %p84 = por %p82, %p83
      %p85 = scmp.ne.s32.totalorder %s73, %s74
      %p86 = scmp.eq.s32.totalorder %s22, 1
      %p87 = por %p85, %p86
      %p89 = scmp.ne.s32.totalorder %s74, %s88
      %p90 = scmp.eq.s32.totalorder %s22, 0
      %p91 = por %p89, %p90
      %s92 = ssub.s32 %s16, %s23
      %p93 = scmp.eq.s32.totalorder %s92, 0
      %s95 = sadd.s32 %s94, 1
      %s96 = scalar_select %p93, %s94, %s95
      %p99 = pneg %p93
      %p100 = scmp.eq.s32.totalorder %s16, 1
      %p101 = por %p99, %p100
      %p102 = scmp.ne.s32.totalorder %s94, %s97
      %p103 = scmp.eq.s32.totalorder %s16, 0
      %p104 = por %p102, %p103
      %p105 = scmp.ne.s32.totalorder %s94, %s97
      %p106 = scmp.eq.s32.totalorder %s21, 1
      %p107 = por %p105, %p106
      %p108 = scmp.ne.s32.totalorder %s97, %s98
      %p109 = scmp.eq.s32.totalorder %s21, 0
      %p110 = por %p108, %p109
      %p111 = scmp.ne.s32.totalorder %s97, %s98
      %p112 = scmp.eq.s32.totalorder %s22, 1
      %p113 = por %p111, %p112
      %p115 = scmp.ne.s32.totalorder %s98, %s114
      %p116 = scmp.eq.s32.totalorder %s22, 0
      %p117 = por %p115, %p116
      %p118 = scmp.le.s32.totalorder 1, %s16
      %p119 = scmp.lt.s32.totalorder %s16, 3
      %p120 = pnand %p118, %p119
      %p121 = pneg %p120
      // Predicated region
      $region9: #{tpu_custom_call.1} parent=5 // pred_check
        _
      $region10: #{tpu_custom_call.1} parent=5 // pred_check_branch
        %123 = sbr.rel (%p120) target = $region12
      $region11: #{tpu_custom_call.1} parent=5 // pred_region
        %s124 = ssub.s32 %s16, 1
        // Predicated region
        $region13: #{tpu_custom_call.1} parent=11 // pred_check
          %p125 = pneg %p63
        $region14: #{tpu_custom_call.1} parent=11 // pred_check_branch
          %127 = sbr.rel (%p125) target = $region16
        $region15: #{tpu_custom_call.1} parent=11 // pred_region
          %s129 = ssub.s32 6144, 6144
          %130 = vsyncadd [#allocation7], %s129
          %s131 = sshll.u32 [#allocation6], 4
          %s132 = int_to_ptr.vmem [resolvable:$true] %s131
          %137 = dma.hbm_to_vmem [thread:$0]  %s1, 6144, %s132, [#allocation7], 128, 128, 8
        $region16: #{tpu_custom_call.1} parent=11 // pred_fallthru
          _
        // Predicated region
        $region17: #{tpu_custom_call.1} parent=11 // pred_check
          %p138 = pneg %p84
        $region18: #{tpu_custom_call.1} parent=11 // pred_check_branch
          %140 = sbr.rel (%p138) target = $region20
        $region19: #{tpu_custom_call.1} parent=11 // pred_region
          _
        $region20: #{tpu_custom_call.1} parent=11 // pred_fallthru
          _
      $region12: #{tpu_custom_call.1} parent=5 // pred_fallthru
        _
      %p141 = scmp.lt.s32.totalorder %s16, 2
      // Predicated region
      $region21: #{tpu_custom_call.1} parent=5 // pred_check
        %p142 = pneg %p141
      $region22: #{tpu_custom_call.1} parent=5 // pred_check_branch
        %144 = sbr.rel (%p142) target = $region24
      $region23: #{tpu_custom_call.1} parent=5 // pred_region
        // Predicated region
        $region25: #{tpu_custom_call.1} parent=23 // pred_check
          %p145 = pneg %p36
        $region26: #{tpu_custom_call.1} parent=23 // pred_check_branch
          %147 = sbr.rel (%p145) target = $region28
        $region27: #{tpu_custom_call.1} parent=23 // pred_region
          %s148 = sand.u32 %s26, 1
          %s149 = scalar_lea.sflag [#allocation4], %s148
          %s150 = sand.u32 %s26, 1
          %s151 = smul.addr %s150, 16
          %s152 = scalar_lea.vmem [#allocation3], %s151
          %s153 = smul.u32 2, %s16
          %s155 = ssub.s32 256, 256
          %156 = vsyncadd %s149, %s155
          %s157 = smul.addr %s153, 128
          %s158 = scalar_lea.hbm %s0, %s157
          %s159 = sshll.u32 %s152, 4
          %s160 = int_to_ptr.vmem [resolvable:$true] %s159
          %165 = dma.hbm_to_vmem [thread:$0]  %s158, 256, %s160, %s149, 128, 128, 8
        $region28: #{tpu_custom_call.1} parent=23 // pred_fallthru
          _
      $region24: #{tpu_custom_call.1} parent=5 // pred_fallthru
        _
      %p166 = scmp.le.s32.totalorder 1, %s16
      %p167 = scmp.lt.s32.totalorder %s16, 3
      %p168 = pnand %p166, %p167
      %p169 = pneg %p168
      // Predicated region
      $region29: #{tpu_custom_call.1} parent=5 // pred_check
        _
      $region30: #{tpu_custom_call.1} parent=5 // pred_check_branch
        %171 = sbr.rel (%p168) target = $region32
      $region31: #{tpu_custom_call.1} parent=5 // pred_region
        %s172 = ssub.s32 %s16, 1
        %s173 = sand.u32 %s29, 1
        %s174 = scalar_lea.sflag [#allocation4], %s173
        %s175 = sand.u32 %s29, 1
        %s176 = smul.addr %s175, 16
        %s177 = scalar_lea.vmem [#allocation3], %s176
        // Predicated region
        $region33: #{tpu_custom_call.1} parent=31 // pred_check
          %p178 = pneg %p42
        $region34: #{tpu_custom_call.1} parent=31 // pred_check_branch
          %180 = sbr.rel (%p178) target = $region36
        $region35: #{tpu_custom_call.1} parent=31 // pred_region
          %181 = dma.done %s174, 256
        $region36: #{tpu_custom_call.1} parent=31 // pred_fallthru
          _
        // Predicated region
        $region37: #{tpu_custom_call.1} parent=31 // pred_check
          %p182 = pneg %p63
        $region38: #{tpu_custom_call.1} parent=31 // pred_check_branch
          %184 = sbr.rel (%p182) target = $region40
        $region39: #{tpu_custom_call.1} parent=31 // pred_region
          %185 = dma.done [#allocation7], 6144
        $region40: #{tpu_custom_call.1} parent=31 // pred_fallthru
          _
        %s186 = sand.u32 %s29, 1
        %s187 = scalar_lea.sflag [#allocation4], %s186
        %s188 = sand.u32 %s29, 1
        %s189 = smul.addr %s188, 16
        %s190 = scalar_lea.vmem [#allocation3], %s189
        %p191 = pneg %p42
        %p192 = pneg %p39
        %p193 = pneg %p63
        %p194 = pneg %p60
        %p195 = pneg %p84
        %p196 = pneg %p81
        %p197 = pneg %p110
        %p198 = pneg %p107
        %s199 = sand.u32 %s97, 1
        %s200 = scalar_lea.sflag [#allocation5], %s199
        %s201 = sand.u32 %s97, 1
        %s202 = smul.addr %s201, 16
        %s203 = scalar_lea.vmem [#allocation8], %s202
        %s204 = smul.u32 2, %s21
        %s205 = smul.u32 2, %s21
        %206 = vst [vmem:[#allocation2] sm:$0x1] 0.0
        %207 = vst [vmem:[#allocation2 + $0x10] sm:$0x1] 0.0
        %208 = vst [vmem:[#allocation2 + $0x9] sm:$0x1] 0.0
        %209 = vst [vmem:[#allocation2 + $0x19] sm:$0x1] 0.0
        %v210 = vld [vmem:[%s177] sm:$0xff]
        %v211 = vld [vmem:[%s177 + $0x8] sm:$0xff]
        %212 = vst [vmem:[#allocation2 + $0x1] sm:$0xff] %v210
        %213 = vst [vmem:[#allocation2 + $0x11] sm:$0xff] %v211
        %v214 = vld [vmem:[#allocation2] sm:$0xff]
        %v215 = vld [vmem:[#allocation2 + $0x10] sm:$0xff]
        %v216 = vld [vmem:[#allocation2 + $0x1] sm:$0xff]
        %v217 = vld [vmem:[#allocation2 + $0x11] sm:$0xff]
        %v218 = vld [vmem:[#allocation2 + $0x2] sm:$0xff]
        %v219 = vld [vmem:[#allocation2 + $0x12] sm:$0xff]
        %v220 = vld [vmem:[#allocation6] sm:$0xff]
        %v221 = vld [vmem:[#allocation6 + $0x8] sm:$0xff]
        %v222 = vld [vmem:[#allocation6 + $0x10] sm:$0xff]
        %v223 = vld [vmem:[#allocation6 + $0x18] sm:$0xff]
        %v224 = vld [vmem:[#allocation6 + $0x20] sm:$0xff]
        %v225 = vld [vmem:[#allocation6 + $0x28] sm:$0xff]
        %v226 = vld [vmem:[#allocation6 + $0x30] sm:$0xff]
        %v227 = vld [vmem:[#allocation6 + $0x38] sm:$0xff]
        %v228 = vld [vmem:[#allocation6 + $0x40] sm:$0xff]
        %v229 = vld [vmem:[#allocation6 + $0x48] sm:$0xff]
        %v230 = vld [vmem:[#allocation6 + $0x50] sm:$0xff]
        %v231 = vld [vmem:[#allocation6 + $0x58] sm:$0xff]
        %v232 = vld [vmem:[#allocation6 + $0x60] sm:$0xff]
        %v233 = vld [vmem:[#allocation6 + $0x68] sm:$0xff]
        %v234 = vld [vmem:[#allocation6 + $0x70] sm:$0xff]
        %v235 = vld [vmem:[#allocation6 + $0x78] sm:$0xff]
        %v236 = vld [vmem:[#allocation6 + $0x80] sm:$0xff]
        %v237 = vld [vmem:[#allocation6 + $0x88] sm:$0xff]
        %v238 = vld [vmem:[#allocation6 + $0x90] sm:$0xff]
        %v239 = vld [vmem:[#allocation6 + $0x98] sm:$0xff]
        %v240 = vld [vmem:[#allocation6 + $0xa0] sm:$0xff]
        %v241 = vld [vmem:[#allocation6 + $0xa8] sm:$0xff]
        %v242 = vld [vmem:[#allocation6 + $0xb0] sm:$0xff]
        %v243 = vld [vmem:[#allocation6 + $0xb8] sm:$0xff]
        %v244 = vld [vmem:[#allocation6 + $0xc0] sm:$0xff]
        %v245 = vld [vmem:[#allocation6 + $0xc8] sm:$0xff]
        %v246 = vld [vmem:[#allocation6 + $0xd0] sm:$0xff]
        %v247 = vld [vmem:[#allocation6 + $0xd8] sm:$0xff]
        %v248 = vld [vmem:[#allocation6 + $0xe0] sm:$0xff]
        %v249 = vld [vmem:[#allocation6 + $0xe8] sm:$0xff]
        %v250 = vld [vmem:[#allocation6 + $0xf0] sm:$0xff]
        %v251 = vld [vmem:[#allocation6 + $0xf8] sm:$0xff]
        %v252 = vld [vmem:[#allocation6 + $0x100] sm:$0xff]
        %v253 = vld [vmem:[#allocation6 + $0x108] sm:$0xff]
        %v254 = vld [vmem:[#allocation6 + $0x110] sm:$0xff]
        %v255 = vld [vmem:[#allocation6 + $0x118] sm:$0xff]
        %v256 = vld [vmem:[#allocation6 + $0x120] sm:$0xff]
        %v257 = vld [vmem:[#allocation6 + $0x128] sm:$0xff]
        %v258 = vld [vmem:[#allocation6 + $0x130] sm:$0xff]
        %v259 = vld [vmem:[#allocation6 + $0x138] sm:$0xff]
        %v260 = vld [vmem:[#allocation6 + $0x140] sm:$0xff]
        %v261 = vld [vmem:[#allocation6 + $0x148] sm:$0xff]
        %v262 = vld [vmem:[#allocation6 + $0x150] sm:$0xff]
        %v263 = vld [vmem:[#allocation6 + $0x158] sm:$0xff]
        %v264 = vld [vmem:[#allocation6 + $0x160] sm:$0xff]
        %v265 = vld [vmem:[#allocation6 + $0x168] sm:$0xff]
        %v266 = vld [vmem:[#allocation6 + $0x170] sm:$0xff]
        %v267 = vld [vmem:[#allocation6 + $0x178] sm:$0xff]
        %v268 = vld [vmem:[%s2] sm:$0x1]
        %v270 = vlaneseq
        %v271 = vshrl.u32 %v270, 7
        %v272 = vsub.s32 0, %v271
        %v273 = vrot.slane %v268, %v272
        %275 = vmatprep.subr.mxu0 0.0
        %276 = vmatpush1.msra.mxu0 %v235
        %277 = vmatprep.subr.mxu0 0.0
        %278 = vmatpush1.msra.mxu0 %v234
        %279 = vmatprep.subr.mxu0 0.0
        %280 = vmatpush1.msra.mxu0 %v233
        %281 = vmatprep.subr.mxu0 0.0
        %282 = vmatpush1.msra.mxu0 %v232
        %283 = vmatprep.subr.mxu0 0.0
        %284 = vmatpush1.msra.mxu0 %v231
        %285 = vmatprep.subr.mxu0 0.0
        %286 = vmatpush1.msra.mxu0 %v230
        %287 = vmatprep.subr.mxu0 0.0
        %288 = vmatpush1.msra.mxu0 %v229
        %289 = vmatprep.subr.mxu0 0.0
        %290 = vmatpush1.msra.mxu0 %v228
        %291 = vmatprep.subr.mxu0 0.0
        %292 = vmatpush1.msra.mxu0 %v227
        %293 = vmatprep.subr.mxu0 0.0
        %294 = vmatpush1.msra.mxu0 %v226
        %295 = vmatprep.subr.mxu0 0.0
        %296 = vmatpush1.msra.mxu0 %v225
        %297 = vmatprep.subr.mxu0 0.0
        %298 = vmatpush1.msra.mxu0 %v224
        %299 = vmatprep.subr.mxu0 0.0
        %300 = vmatpush1.msra.mxu0 %v223
        %301 = vmatprep.subr.mxu0 0.0
        %302 = vmatpush1.msra.mxu0 %v222
        %303 = vmatprep.subr.mxu0 0.0
        %304 = vmatpush1.msra.mxu0 %v221
        %305 = vmatprep.subr.mxu0 0.0
        %306 = vmatpush1.msra.mxu0 %v220
        %307 = vmatprep.subr.mxu0 0.0
        %308 = vmatpush2.msra.mxu0 %v251
        %309 = vmatprep.subr.mxu0 0.0
        %310 = vmatpush2.msra.mxu0 %v250
        %311 = vmatprep.subr.mxu0 0.0
        %312 = vmatpush2.msra.mxu0 %v249
        %313 = vmatprep.subr.mxu0 0.0
        %314 = vmatpush2.msra.mxu0 %v248
        %315 = vmatprep.subr.mxu0 0.0
        %316 = vmatpush2.msra.mxu0 %v247
        %317 = vmatprep.subr.mxu0 0.0
        %318 = vmatpush2.msra.mxu0 %v246
        %319 = vmatprep.subr.mxu0 0.0
        %320 = vmatpush2.msra.mxu0 %v245
        %321 = vmatprep.subr.mxu0 0.0
        %322 = vmatpush2.msra.mxu0 %v244
        %323 = vmatprep.subr.mxu0 0.0
        %324 = vmatpush2.msra.mxu0 %v243
        %325 = vmatprep.subr.mxu0 0.0
        %326 = vmatpush2.msra.mxu0 %v242
        %327 = vmatprep.subr.mxu0 0.0
        %328 = vmatpush2.msra.mxu0 %v241
        %329 = vmatprep.subr.mxu0 0.0
        %330 = vmatpush2.msra.mxu0 %v240
        %331 = vmatprep.subr.mxu0 0.0
        %332 = vmatpush2.msra.mxu0 %v239
        %333 = vmatprep.subr.mxu0 0.0
        %334 = vmatpush2.msra.mxu0 %v238
        %335 = vmatprep.subr.mxu0 0.0
        %336 = vmatpush2.msra.mxu0 %v237
        %337 = vmatprep.subr.mxu0 0.0
        %338 = vmatpush2.msra.mxu0 %v236
        %339 = vmatprep.mubr.f32.mxu0 %v216
        %340 = vmatmul.mubr.f32.gmra.mxu0 %v214
        %v341 = vpop.f32.mrf.mxu0
        %v342 = vadd.f32 %v273, %v341
        %v343 = vpop.f32.mrf.mxu0
        %344 = vmatprep.mubr.f32.mxu0 %v217
        %345 = vmatmul.mubr.f32.gmra.mxu0 %v215
        %v346 = vpop.f32.mrf.mxu0
        %v347 = vadd.f32 %v273, %v346
        %v348 = vpop.f32.mrf.mxu0
        %349 = vdwg.mxu0
        %350 = vmatprep.subr.mxu0 0.0
        %351 = vmatpush1.msra.mxu0 %v267
        %352 = vmatprep.subr.mxu0 0.0
        %353 = vmatpush1.msra.mxu0 %v266
        %354 = vmatprep.subr.mxu0 0.0
        %355 = vmatpush1.msra.mxu0 %v265
        %356 = vmatprep.subr.mxu0 0.0
        %357 = vmatpush1.msra.mxu0 %v264
        %358 = vmatprep.subr.mxu0 0.0
        %359 = vmatpush1.msra.mxu0 %v263
        %360 = vmatprep.subr.mxu0 0.0
        %361 = vmatpush1.msra.mxu0 %v262
        %362 = vmatprep.subr.mxu0 0.0
        %363 = vmatpush1.msra.mxu0 %v261
        %364 = vmatprep.subr.mxu0 0.0
        %365 = vmatpush1.msra.mxu0 %v260
        %366 = vmatprep.subr.mxu0 0.0
        %367 = vmatpush1.msra.mxu0 %v259
        %368 = vmatprep.subr.mxu0 0.0
        %369 = vmatpush1.msra.mxu0 %v258
        %370 = vmatprep.subr.mxu0 0.0
        %371 = vmatpush1.msra.mxu0 %v257
        %372 = vmatprep.subr.mxu0 0.0
        %373 = vmatpush1.msra.mxu0 %v256
        %374 = vmatprep.subr.mxu0 0.0
        %375 = vmatpush1.msra.mxu0 %v255
        %376 = vmatprep.subr.mxu0 0.0
        %377 = vmatpush1.msra.mxu0 %v254
        %378 = vmatprep.subr.mxu0 0.0
        %379 = vmatpush1.msra.mxu0 %v253
        %380 = vmatprep.subr.mxu0 0.0
        %381 = vmatpush1.msra.mxu0 %v252
        %382 = vmatprep.subr.mxu0 0.0
        %383 = vmatpush2.msra.mxu0 0.0
        %384 = vmatprep.subr.mxu0 0.0
        %385 = vmatpush2.msra.mxu0 0.0
        %386 = vmatprep.subr.mxu0 0.0
        %387 = vmatpush2.msra.mxu0 0.0
        %388 = vmatprep.subr.mxu0 0.0
        %389 = vmatpush2.msra.mxu0 0.0
        %390 = vmatprep.subr.mxu0 0.0
        %391 = vmatpush2.msra.mxu0 0.0
        %392 = vmatprep.subr.mxu0 0.0
        %393 = vmatpush2.msra.mxu0 0.0
        %394 = vmatprep.subr.mxu0 0.0
        %395 = vmatpush2.msra.mxu0 0.0
        %396 = vmatprep.subr.mxu0 0.0
        %397 = vmatpush2.msra.mxu0 0.0
        %398 = vmatprep.subr.mxu0 0.0
        %399 = vmatpush2.msra.mxu0 0.0
        %400 = vmatprep.subr.mxu0 0.0
        %401 = vmatpush2.msra.mxu0 0.0
        %402 = vmatprep.subr.mxu0 0.0
        %403 = vmatpush2.msra.mxu0 0.0
        %404 = vmatprep.subr.mxu0 0.0
        %405 = vmatpush2.msra.mxu0 0.0
        %406 = vmatprep.subr.mxu0 0.0
        %407 = vmatpush2.msra.mxu0 0.0
        %408 = vmatprep.subr.mxu0 0.0
        %409 = vmatpush2.msra.mxu0 0.0
        %410 = vmatprep.subr.mxu0 0.0
        %411 = vmatpush2.msra.mxu0 0.0
        %412 = vmatprep.subr.mxu0 0.0
        %413 = vmatpush2.msra.mxu0 0.0
        %414 = vmatprep.mubr.f32.mxu0 0.0
        %415 = vmatmul.mubr.f32.gmra.mxu0 %v218
        %v416 = vpop.f32.mrf.mxu0
        %v417 = vadd.f32 %v342, %v416
        %v418 = vpop.f32.mrf.mxu0
        %419 = vmatprep.mubr.f32.mxu0 0.0
        %420 = vmatmul.mubr.f32.gmra.mxu0 %v219
        %v421 = vpop.f32.mrf.mxu0
        %v422 = vadd.f32 %v347, %v421
        %v423 = vpop.f32.mrf.mxu0
        %424 = vdwg.mxu0
        %v425 = vmax.f32 %v417, 0.0
        %v426 = vmax.f32 %v422, 0.0
        %427 = vst [vmem:[%s203] sm:$0xff] %v425
        %428 = vst [vmem:[%s203 + $0x8] sm:$0xff] %v426
        %s429 = sand.u32 %s97, 1
        %s430 = scalar_lea.sflag [#allocation5], %s429
        %s431 = sand.u32 %s97, 1
        %s432 = smul.addr %s431, 16
        %s433 = scalar_lea.vmem [#allocation8], %s432
        // Predicated region
        $region41: #{tpu_custom_call.1} parent=31 // pred_check
          %p434 = pneg %p107
        $region42: #{tpu_custom_call.1} parent=31 // pred_check_branch
          %436 = sbr.rel (%p434) target = $region44
        $region43: #{tpu_custom_call.1} parent=31 // pred_region
          %s437 = smul.u32 2, %s21
          %s439 = ssub.s32 256, 256
          %440 = vsyncadd %s430, %s439
          %s441 = smul.addr %s437, 128
          %s442 = scalar_lea.hbm %s3, %s441
          %s443 = sshll.u32 %s433, 4
          %s444 = int_to_ptr.vmem [resolvable:$true] %s443
          %449 = dma.vmem_to_hbm [thread:$0]  %s444, 256, %s442, %s430, 128, 128, 8
        $region44: #{tpu_custom_call.1} parent=31 // pred_fallthru
          _
      $region32: #{tpu_custom_call.1} parent=5 // pred_fallthru
        _
      %p450 = scmp.le.s32.totalorder 2, %s16
      // Predicated region
      $region45: #{tpu_custom_call.1} parent=5 // pred_check
        %p451 = pneg %p450
      $region46: #{tpu_custom_call.1} parent=5 // pred_check_branch
        %453 = sbr.rel (%p451) target = $region48
      $region47: #{tpu_custom_call.1} parent=5 // pred_region
        %s454 = ssub.s32 %s16, 2
        // Predicated region
        $region49: #{tpu_custom_call.1} parent=47 // pred_check
          %p455 = pneg %p113
        $region50: #{tpu_custom_call.1} parent=47 // pred_check_branch
          %457 = sbr.rel (%p455) target = $region52
        $region51: #{tpu_custom_call.1} parent=47 // pred_region
          %s458 = sand.u32 %s98, 1
          %s459 = scalar_lea.sflag [#allocation5], %s458
          %s460 = sand.u32 %s98, 1
          %s461 = smul.addr %s460, 16
          %s462 = scalar_lea.vmem [#allocation8], %s461
          %463 = dma.done %s459, 256
        $region52: #{tpu_custom_call.1} parent=47 // pred_fallthru
          _
      $region48: #{tpu_custom_call.1} parent=5 // pred_fallthru
        _
    $region6: #{tpu_custom_call.1} parent=1 // loop_footer
      %s20 = sadd.s32 1, %s16
    $region7: #{tpu_custom_call.1} parent=1 // loop_footer_branch
      %15 = sbr.rel target = $region3
    $region8: #{tpu_custom_call.1} parent=1 // loop_exit
      _
    %464 = vsyncpa [#allocation4], 1
    %s465 = scalar_lea.sflag [#allocation4], 1
    %466 = vsyncpa %s465, 1
    %467 = vsyncpa [#allocation7], 1
    %468 = vsyncpa [#allocation5], 1
    %s469 = scalar_lea.sflag [#allocation5], 1
    %470 = vsyncpa %s469, 1

</llo_original>
